<compile_context>
chip_gen: v5e
topology: v5e:2x2
jax: 0.10.0
libtpu: 0.0.40
codegen_flags: <defaults>
</compile_context>

<pallas_src>
import functools

import jax
import jax.numpy as jnp
from jax.experimental import pallas as pl
from jax.experimental.pallas import tpu as pltpu


def _lora_kernel(x_ref, down_ref, up_ref, o_ref, *, scale):
    # x_ref:    (tm, in_features)   compute dtype (weight dtype, e.g. bf16)
    # down_ref: (in_features, rank) weight dtype
    # up_ref:   (rank, out_features) weight dtype
    # o_ref:    (tm, out_features)  original input dtype
    # First matmul: MXU-native operands, f32 accumulation.
    h = jnp.dot(x_ref[...], down_ref[...], preferred_element_type=jnp.float32)  # (tm, rank)
    if scale != 1.0:
        # Apply the network_alpha/rank scale on the tiny (tm, rank) intermediate
        # instead of the (tm, out_features) output slab.
        h = h * scale
    # Second matmul: K = rank is tiny, keep f32 for numerics.
    y = jnp.dot(h, up_ref[...].astype(jnp.float32), preferred_element_type=jnp.float32)
    o_ref[...] = y.astype(o_ref.dtype)


def _pick_tm(M, in_features, out_features, x_bytes, o_bytes,
             tm_max=512, vmem_budget=24 << 20):
    # Tile is a multiple of 16 (covers bf16 sublane packing for x and y tiles) and
    # sized so the double-buffered x-in / y-out working set stays inside a budget
    # that fits every generation (v7x has only 64 MiB VMEM per TensorCore).
    tm = tm_max
    while tm > 16:
        work = 2 * tm * in_features * x_bytes + 2 * tm * out_features * o_bytes
        if work <= vmem_budget:
            break
        tm //= 2
    tm = max(16, tm)
    # Never exceed the (16-rounded) row count.
    tm = min(tm, ((M + 15) // 16) * 16)
    return tm


def lora_linear_pallas(hidden_states, down_mat, up_mat, network_alpha=None,
                       rank=4, tm=None):
    """hidden_states: (..., in_features), any float dtype (orig_dtype)
       down_mat:      (in_features, rank)   == W_down^T of the torch Linear
       up_mat:        (rank, out_features)  == W_up^T of the torch Linear
    """
    orig_dtype = hidden_states.dtype
    in_features, r = down_mat.shape
    r2, out_features = up_mat.shape
    assert r == rank and r2 == rank

    compute_dtype = down_mat.dtype            # torch: hidden_states.to(weight dtype)
    x_bytes = jnp.dtype(compute_dtype).itemsize
    o_bytes = jnp.dtype(orig_dtype).itemsize

    x2 = hidden_states.reshape(-1, in_features)
    if x2.dtype != compute_dtype:
        x2 = x2.astype(compute_dtype)
    M = x2.shape[0]

    if tm is None:
        tm = _pick_tm(M, in_features, out_features, x_bytes, o_bytes)

    # Pad rows up to a tile multiple (real batch*seq rarely divides a big tile).
    n_blocks = pl.cdiv(M, tm)
    M_pad = n_blocks * tm
    if M_pad != M:
        x2 = jnp.pad(x2, ((0, M_pad - M), (0, 0)))

    scale = 1.0 if network_alpha is None else float(network_alpha) / float(rank)

    w_bytes = (in_features * rank + rank * out_features) * jnp.dtype(down_mat.dtype).itemsize
    cost = pl.CostEstimate(
        flops=2 * M_pad * rank * (in_features + out_features),
        transcendentals=0,
        bytes_accessed=M_pad * in_features * x_bytes
                       + M_pad * out_features * o_bytes
                       + w_bytes,
    )

    # Explicit VMEM budget: default scoped limit (16-32 MiB) would reject the big
    # tiles on v5e/v6e; stay well under v7x's 64 MiB per-TC physical VMEM.
    vmem_need = (2 * tm * in_features * x_bytes
                 + 2 * tm * out_features * o_bytes
                 + 2 * w_bytes)
    vmem_limit = int(min(60 << 20, max(32 << 20, 2 * vmem_need)))

    out = pl.pallas_call(
        functools.partial(_lora_kernel, scale=scale),
        out_shape=jax.ShapeDtypeStruct((M_pad, out_features), orig_dtype),
        grid_spec=pltpu.PrefetchScalarGridSpec(
            num_scalar_prefetch=0,
            grid=(n_blocks,),
            in_specs=[
                # x streams per row-tile.
                pl.BlockSpec((tm, in_features), lambda i: (i, 0)),
                # Weights use a constant block index -> Pallas keeps them resident
                # in VMEM (no per-step re-DMA).
                pl.BlockSpec((in_features, rank), lambda i: (0, 0)),
                pl.BlockSpec((rank, out_features), lambda i: (0, 0)),
            ],
            out_specs=pl.BlockSpec((tm, out_features), lambda i: (i, 0)),
        ),
        compiler_params=pltpu.CompilerParams(
            dimension_semantics=("parallel",),   # lets v7x's 2 TCs split the row loop
            vmem_limit_bytes=vmem_limit),
        cost_estimate=cost,
    )(x2, down_mat, up_mat)

    out = out[:M]
    return out.reshape(hidden_states.shape[:-1] + (out_features,))


if __name__ == "__main__":
    key = jax.random.PRNGKey(0)
    k_x, k_down, k_up, k_di, k_do = jax.random.split(key, 5)

    batch, seq = 2, 70                       # M = 140: exercises the row-padding path
    in_features, out_features, rank = 256, 128, 4   # out multiple of 128 -> lane-dense stores
    network_alpha = 8.0

    # bf16 activations AND bf16 weights (MXU-native); f32 accumulation inside the kernel.
    x = jax.random.normal(k_x, (batch, seq, in_features), jnp.float32).astype(jnp.bfloat16)

    # ---- default (non-lphm) parameters ----
    # torch: W_down (rank, in) ~ N(0, 1/rank), W_up (out, rank) = zeros.
    # NOTE: the module inits W_up to zeros (output would be identically 0);
    # use a small deterministic random W_up so the kernel compute is exercised.
    w_down = (1.0 / rank) * jax.random.normal(k_down, (rank, in_features), jnp.float32)
    w_up = 0.02 * jax.random.normal(k_up, (out_features, rank), jnp.float32)
    down_mat = w_down.T.astype(jnp.bfloat16)     # (in, rank)
    up_mat = w_up.T.astype(jnp.bfloat16)         # (rank, out)

    y = lora_linear_pallas(x, down_mat, up_mat, network_alpha=network_alpha, rank=rank)
    y = jax.block_until_ready(y)

    def ref(xx, dmat, umat, alpha):
        # Pure-JAX reference matching the torch forward semantics.
        xr = xx.astype(dmat.dtype).astype(jnp.float32)
        yy = (xr @ dmat.astype(jnp.float32)) @ umat.astype(jnp.float32)
        if alpha is not None:
            yy = yy * (alpha / rank)
        return yy.astype(xx.dtype)

    y_ref = ref(x, down_mat, up_mat, network_alpha)
    assert y.shape == (batch, seq, out_features)
    assert y.dtype == x.dtype
    assert jnp.allclose(y.astype(jnp.float32), y_ref.astype(jnp.float32),
                        atol=2e-2, rtol=2e-2)

    # ---- lphm path: down/up built via kron (parameter glue), same kernel ----
    down_in = (1.0 / rank) * jax.random.normal(k_di, (in_features, 1), jnp.float32)
    down_out = (1.0 / rank) * jax.random.normal(k_do, (1, rank), jnp.float32)
    up_in = 0.02 * jnp.ones((rank, 1), jnp.float32)        # module inits zeros; nonzero to exercise
    up_out = 0.02 * jnp.ones((1, out_features), jnp.float32)
    down_mat_lphm = jnp.kron(down_in, down_out).astype(jnp.bfloat16)   # (in, rank)
    up_mat_lphm = jnp.kron(up_in, up_out).astype(jnp.bfloat16)         # (rank, out)

    y2 = lora_linear_pallas(x, down_mat_lphm, up_mat_lphm, network_alpha=None, rank=rank)
    y2 = jax.block_until_ready(y2)
    y2_ref = ref(x, down_mat_lphm, up_mat_lphm, None)
    assert jnp.allclose(y2.astype(jnp.float32), y2_ref.astype(jnp.float32),
                        atol=2e-2, rtol=2e-2)

    print("KERNEL_OK")
</pallas_src>

<mosaic_0001>
module attributes {stable_mosaic.version = 11 : i64} {
  func.func @_lora_kernel(%arg0: i32, %arg1: memref<144x256xbf16, #tpu.memory_space<vmem>>, %arg2: memref<256x4xbf16, #tpu.memory_space<vmem>>, %arg3: memref<4x128xbf16, #tpu.memory_space<vmem>>, %arg4: memref<144x128xbf16, #tpu.memory_space<vmem>>) attributes {dimension_semantics = [#tpu.dimension_semantics<parallel>], iteration_bounds = array<i64: 1>, scalar_prefetch = 0 : i64, scratch_operands = 0 : i64, tpu.core_type = #tpu.core_type<tc>, window_params = [{transform_indices = @transform_0, window_bounds = array<i64: 144, 256>}, {pipeline_mode = #tpu.pipeline_mode<synchronous>, transform_indices = @transform_1, window_bounds = array<i64: 256, 4>}, {pipeline_mode = #tpu.pipeline_mode<synchronous>, transform_indices = @transform_2, window_bounds = array<i64: 4, 128>}, {transform_indices = @transform_3, window_bounds = array<i64: 144, 128>}]} {
    %c0 = arith.constant 0 : index
    %c0_0 = arith.constant 0 : index
    %0 = vector.load %arg1[%c0, %c0_0] : memref<144x256xbf16, #tpu.memory_space<vmem>>, vector<144x256xbf16>
    %c0_1 = arith.constant 0 : index
    %c0_2 = arith.constant 0 : index
    %1 = vector.load %arg2[%c0_1, %c0_2] : memref<256x4xbf16, #tpu.memory_space<vmem>>, vector<256x4xbf16>
    %cst = arith.constant dense<0.000000e+00> : vector<144x4xf32>
    %2 = tpu.matmul %0, %1, %cst {dimension_numbers = #tpu.dot_dimension_numbers<[1], [0], [0], [1], [0, 0, 1, 1], [], []>} : vector<144x256xbf16>, vector<256x4xbf16>, vector<144x4xf32> -> vector<144x4xf32>
    %cst_3 = arith.constant 2.000000e+00 : f32
    %3 = vector.broadcast %cst_3 : f32 to vector<144x4xf32>
    %4 = arith.mulf %2, %3 : vector<144x4xf32>
    %c0_4 = arith.constant 0 : index
    %c0_5 = arith.constant 0 : index
    %5 = vector.load %arg3[%c0_4, %c0_5] : memref<4x128xbf16, #tpu.memory_space<vmem>>, vector<4x128xbf16>
    %6 = arith.extf %5 : vector<4x128xbf16> to vector<4x128xf32>
    %cst_6 = arith.constant dense<0.000000e+00> : vector<144x128xf32>
    %7 = tpu.matmul %4, %6, %cst_6 {dimension_numbers = #tpu.dot_dimension_numbers<[1], [0], [0], [1], [0, 0, 1, 1], [], []>} : vector<144x4xf32>, vector<4x128xf32>, vector<144x128xf32> -> vector<144x128xf32>
    %8 = arith.truncf %7 : vector<144x128xf32> to vector<144x128xbf16>
    %c0_7 = arith.constant 0 : index
    %c0_8 = arith.constant 0 : index
    %9 = vector.load %arg4[%c0_7, %c0_8] : memref<144x128xbf16, #tpu.memory_space<vmem>>, vector<144x128xbf16>
    tpu.vector_store %arg4[%c0_7, %c0_8], %8 {strides = array<i32>} : memref<144x128xbf16, #tpu.memory_space<vmem>>, vector<144x128xbf16>,
    return
  }
  func.func @transform_0(%arg0: i32) -> (i32, i32) {
    %c0_i32 = arith.constant 0 : i32
    %c0_i32_0 = arith.constant 0 : i32
    return %arg0, %c0_i32 : i32, i32
  }
  func.func @transform_1(%arg0: i32) -> (i32, i32) {
    %c0_i32 = arith.constant 0 : i32
    %c0_i32_0 = arith.constant 0 : i32
    %c0_i32_1 = arith.constant 0 : i32
    return %c0_i32, %c0_i32_0 : i32, i32
  }
  func.func @transform_2(%arg0: i32) -> (i32, i32) {
    %c0_i32 = arith.constant 0 : i32
    %c0_i32_0 = arith.constant 0 : i32
    %c0_i32_1 = arith.constant 0 : i32
    return %c0_i32, %c0_i32_0 : i32, i32
  }
  func.func @transform_3(%arg0: i32) -> (i32, i32) {
    %c0_i32 = arith.constant 0 : i32
    %c0_i32_0 = arith.constant 0 : i32
    return %arg0, %c0_i32 : i32, i32
  }
}

</mosaic_0001>

<llo_original>
// kernel: tpu_custom_call.1
$region0: #{tpu_custom_call.1}
  #allocation0 [shape = 'u32[]', space=smem, size = 0x4, offset = 0x4, fixed_abs, tag = 'smem constant byte address 0x4 - core index']
  #allocation1 [shape = 'u32[72,128]{1,0:T(1,128)}', space=vmem, size = 0x9000, scoped, tag = 'internal scratch']
  %s0 = inlined_call_operand.hbm [shape: bf16[144,256], index: 0, kind: input, shape index: {}]
  %s1 = inlined_call_operand.vmem [shape: bf16[256,4], index: 1, kind: input, shape index: {}]
  %s2 = inlined_call_operand.vmem [shape: bf16[4,128], index: 2, kind: input, shape index: {}]
  %s3 = inlined_call_operand.hbm [shape: bf16[144,128], index: 3, kind: output, shape index: {}]
  %s4 = sld [smem:[#allocation0]]
  $region26: #{tpu_custom_call.1} parent=0
    _
  %s6 = ssub.s32 1, %s4
  %s7 = scalar_select 0, %s6, %s4
  $region1: #{tpu_custom_call.1} parent=0
    #allocation2 [shape = 'u8[73728]{0}', space=vmem, size = 0x12000, scoped, tag = 'input window, operand 0, single buffered']
    #allocation3 [shape = 's32[1]{0}', space=sflag, size = 0x4, scoped, tag = 'scoped memory for tpu_custom_call.1']
    #allocation4 [shape = 's32[1]{0}', space=sflag, size = 0x4, scoped, tag = 'scoped memory for tpu_custom_call.1']
    #allocation5 [shape = 'u8[36864]{0}', space=vmem, size = 0x9000, scoped, tag = 'output window, operand 0, single buffered']
    %8 = vsyncpa [#allocation3], 0
    %9 = vsyncpa [#allocation4], 0
    // Predicated region
    $region2: #{tpu_custom_call.1} parent=1 // pred_check
      _
    $region3: #{tpu_custom_call.1} parent=1 // pred_check_branch
      %11 = sbr.rel (0) target = $region5
    $region4: #{tpu_custom_call.1} parent=1 // pred_region
      %13 = vsyncadd [#allocation3], 0
      %s14 = sshll.u32 %s0, 4
      %s15 = int_to_ptr.hbm [resolvable:$true] %s14
      %s16 = sshll.u32 [#allocation2], 4
      %s17 = int_to_ptr.vmem [resolvable:$true] %s16
      %22 = dma.hbm_to_vmem [thread:$0]  %s15, 2304, %s17, [#allocation3], 128, 128, 8
    $region5: #{tpu_custom_call.1} parent=1 // pred_fallthru
      _
    // Predicated region
    $region6: #{tpu_custom_call.1} parent=1 // pred_check
      _
    $region7: #{tpu_custom_call.1} parent=1 // pred_check_branch
      %24 = sbr.rel (0) target = $region9
    $region8: #{tpu_custom_call.1} parent=1 // pred_region
      _
    $region9: #{tpu_custom_call.1} parent=1 // pred_fallthru
      _
    // Predicated region
    $region10: #{tpu_custom_call.1} parent=1 // pred_check
      _
    $region11: #{tpu_custom_call.1} parent=1 // pred_check_branch
      %26 = sbr.rel (0) target = $region13
    $region12: #{tpu_custom_call.1} parent=1 // pred_region
      _
    $region13: #{tpu_custom_call.1} parent=1 // pred_fallthru
      _
    // Predicated region
    $region14: #{tpu_custom_call.1} parent=1 // pred_check
      _
    $region15: #{tpu_custom_call.1} parent=1 // pred_check_branch
      %28 = sbr.rel (0) target = $region17
    $region16: #{tpu_custom_call.1} parent=1 // pred_region
      %30 = dma.done [#allocation3], 2304
    $region17: #{tpu_custom_call.1} parent=1 // pred_fallthru
      _
    %v31 = vld [vmem:[#allocation2] sm:$0xff]
    %v32 = vld [vmem:[#allocation2 + $0x8] sm:$0xff]
    %v33 = vld [vmem:[#allocation2 + $0x10] sm:$0xff]
    %v34 = vld [vmem:[#allocation2 + $0x18] sm:$0xff]
    %v35 = vld [vmem:[#allocation2 + $0x20] sm:$0xff]
    %v36 = vld [vmem:[#allocation2 + $0x28] sm:$0xff]
    %v37 = vld [vmem:[#allocation2 + $0x30] sm:$0xff]
    %v38 = vld [vmem:[#allocation2 + $0x38] sm:$0xff]
    %v39 = vld [vmem:[#allocation2 + $0x40] sm:$0xff]
    %v40 = vld [vmem:[#allocation2 + $0x48] sm:$0xff]
    %v41 = vld [vmem:[#allocation2 + $0x50] sm:$0xff]
    %v42 = vld [vmem:[#allocation2 + $0x58] sm:$0xff]
    %v43 = vld [vmem:[#allocation2 + $0x60] sm:$0xff]
    %v44 = vld [vmem:[#allocation2 + $0x68] sm:$0xff]
    %v45 = vld [vmem:[#allocation2 + $0x70] sm:$0xff]
    %v46 = vld [vmem:[#allocation2 + $0x78] sm:$0xff]
    %v47 = vld [vmem:[#allocation2 + $0x80] sm:$0xff]
    %v48 = vld [vmem:[#allocation2 + $0x88] sm:$0xff]
    %v49 = vld [vmem:[%s1] sm:$0xf]
    %v50 = vld [vmem:[%s1 + $0x4] sm:$0xf]
    %v51 = vld [vmem:[%s1 + $0x8] sm:$0xf]
    %v52 = vld [vmem:[%s1 + $0xc] sm:$0xf]
    %v53 = vld [vmem:[%s1 + $0x10] sm:$0xf]
    %v54 = vld [vmem:[%s1 + $0x14] sm:$0xf]
    %v55 = vld [vmem:[%s1 + $0x18] sm:$0xf]
    %v56 = vld [vmem:[%s1 + $0x1c] sm:$0xf]
    %v57 = vld [vmem:[%s1 + $0x20] sm:$0xf]
    %v58 = vld [vmem:[%s1 + $0x24] sm:$0xf]
    %v59 = vld [vmem:[%s1 + $0x28] sm:$0xf]
    %v60 = vld [vmem:[%s1 + $0x2c] sm:$0xf]
    %v61 = vld [vmem:[%s1 + $0x30] sm:$0xf]
    %v62 = vld [vmem:[%s1 + $0x34] sm:$0xf]
    %v63 = vld [vmem:[%s1 + $0x38] sm:$0xf]
    %v64 = vld [vmem:[%s1 + $0x3c] sm:$0xf]
    %v65 = vld [vmem:[%s1 + $0x40] sm:$0xf]
    %v66 = vld [vmem:[%s1 + $0x44] sm:$0xf]
    %v67 = vld [vmem:[%s1 + $0x48] sm:$0xf]
    %v68 = vld [vmem:[%s1 + $0x4c] sm:$0xf]
    %v69 = vld [vmem:[%s1 + $0x50] sm:$0xf]
    %v70 = vld [vmem:[%s1 + $0x54] sm:$0xf]
    %v71 = vld [vmem:[%s1 + $0x58] sm:$0xf]
    %v72 = vld [vmem:[%s1 + $0x5c] sm:$0xf]
    %v73 = vld [vmem:[%s1 + $0x60] sm:$0xf]
    %v74 = vld [vmem:[%s1 + $0x64] sm:$0xf]
    %v75 = vld [vmem:[%s1 + $0x68] sm:$0xf]
    %v76 = vld [vmem:[%s1 + $0x6c] sm:$0xf]
    %v77 = vld [vmem:[%s1 + $0x70] sm:$0xf]
    %v78 = vld [vmem:[%s1 + $0x74] sm:$0xf]
    %v79 = vld [vmem:[%s1 + $0x78] sm:$0xf]
    %v80 = vld [vmem:[%s1 + $0x7c] sm:$0xf]
    %v99 = vunpack.c.l.b16 %v31
    %v100 = vunpack.c.h.b16 %v31
    %v101 = vunpack.c.l.b16 %v32
    %v102 = vunpack.c.h.b16 %v32
    %v103 = vunpack.c.l.b16 %v33
    %v104 = vunpack.c.h.b16 %v33
    %v105 = vunpack.c.l.b16 %v34
    %v106 = vunpack.c.h.b16 %v34
    %v107 = vunpack.c.l.b16 %v35
    %v108 = vunpack.c.h.b16 %v35
    %v109 = vunpack.c.l.b16 %v36
    %v110 = vunpack.c.h.b16 %v36
    %v111 = vunpack.c.l.b16 %v37
    %v112 = vunpack.c.h.b16 %v37
    %v113 = vunpack.c.l.b16 %v38
    %v114 = vunpack.c.h.b16 %v38
    %v115 = vunpack.c.l.b16 %v39
    %v116 = vunpack.c.h.b16 %v39
    %v117 = vunpack.c.l.b16 %v40
    %v118 = vunpack.c.h.b16 %v40
    %v119 = vunpack.c.l.b16 %v41
    %v120 = vunpack.c.h.b16 %v41
    %v121 = vunpack.c.l.b16 %v42
    %v122 = vunpack.c.h.b16 %v42
    %v123 = vunpack.c.l.b16 %v43
    %v124 = vunpack.c.h.b16 %v43
    %v125 = vunpack.c.l.b16 %v44
    %v126 = vunpack.c.h.b16 %v44
    %v127 = vunpack.c.l.b16 %v45
    %v128 = vunpack.c.h.b16 %v45
    %v129 = vunpack.c.l.b16 %v46
    %v130 = vunpack.c.h.b16 %v46
    %v131 = vunpack.c.l.b16 %v47
    %v132 = vunpack.c.h.b16 %v47
    %v133 = vunpack.c.l.b16 %v48
    %v134 = vunpack.c.h.b16 %v48
    %v135 = vpack.c.b16 %v101, %v99
    %v136 = vpack.c.b16 %v102, %v100
    %v137 = vpack.c.b16 %v105, %v103
    %v138 = vpack.c.b16 %v106, %v104
    %v139 = vpack.c.b16 %v109, %v107
    %v140 = vpack.c.b16 %v110, %v108
    %v141 = vpack.c.b16 %v113, %v111
    %v142 = vpack.c.b16 %v114, %v112
    %v143 = vpack.c.b16 %v117, %v115
    %v144 = vpack.c.b16 %v118, %v116
    %v145 = vpack.c.b16 %v121, %v119
    %v146 = vpack.c.b16 %v122, %v120
    %v147 = vpack.c.b16 %v125, %v123
    %v148 = vpack.c.b16 %v126, %v124
    %v149 = vpack.c.b16 %v129, %v127
    %v150 = vpack.c.b16 %v130, %v128
    %v151 = vpack.c.b16 %v133, %v131
    %v152 = vpack.c.b16 %v134, %v132
    %v203 = vunpack.c.l.b16 %v49
    %v204 = vunpack.c.l.b16 %v50
    %v205 = vunpack.c.l.b16 %v51
    %v206 = vunpack.c.l.b16 %v52
    %v207 = vunpack.c.l.b16 %v53
    %v208 = vunpack.c.l.b16 %v54
    %v209 = vunpack.c.l.b16 %v55
    %v210 = vunpack.c.l.b16 %v56
    %v211 = vunpack.c.l.b16 %v57
    %v212 = vunpack.c.l.b16 %v58
    %v213 = vunpack.c.l.b16 %v59
    %v214 = vunpack.c.l.b16 %v60
    %v215 = vunpack.c.l.b16 %v61
    %v216 = vunpack.c.l.b16 %v62
    %v217 = vunpack.c.l.b16 %v63
    %v218 = vunpack.c.l.b16 %v64
    %v219 = vunpack.c.l.b16 %v65
    %v220 = vunpack.c.l.b16 %v66
    %v221 = vunpack.c.l.b16 %v67
    %v222 = vunpack.c.l.b16 %v68
    %v223 = vunpack.c.l.b16 %v69
    %v224 = vunpack.c.l.b16 %v70
    %v225 = vunpack.c.l.b16 %v71
    %v226 = vunpack.c.l.b16 %v72
    %v227 = vunpack.c.l.b16 %v73
    %v228 = vunpack.c.l.b16 %v74
    %v229 = vunpack.c.l.b16 %v75
    %v230 = vunpack.c.l.b16 %v76
    %v231 = vunpack.c.l.b16 %v77
    %v232 = vunpack.c.l.b16 %v78
    %v233 = vunpack.c.l.b16 %v79
    %v234 = vunpack.c.l.b16 %v80
    %v235 = vpack.c.b16 %v204, %v203
    %v236 = vpack.c.b16 %v206, %v205
    %v237 = vpack.c.b16 %v208, %v207
    %v238 = vpack.c.b16 %v210, %v209
    %v239 = vpack.c.b16 %v212, %v211
    %v240 = vpack.c.b16 %v214, %v213
    %v241 = vpack.c.b16 %v216, %v215
    %v242 = vpack.c.b16 %v218, %v217
    %v243 = vpack.c.b16 %v220, %v219
    %v244 = vpack.c.b16 %v222, %v221
    %v245 = vpack.c.b16 %v224, %v223
    %v246 = vpack.c.b16 %v226, %v225
    %v247 = vpack.c.b16 %v228, %v227
    %v248 = vpack.c.b16 %v230, %v229
    %v249 = vpack.c.b16 %v232, %v231
    %v250 = vpack.c.b16 %v234, %v233
    %267 = vmatpush.bf16.msra.mxu0 %v242
    %268 = vmatpush.bf16.msra.mxu0 %v241
    %269 = vmatpush.bf16.msra.mxu0 %v240
    %270 = vmatpush.bf16.msra.mxu0 %v239
    %271 = vmatpush.bf16.msra.mxu0 %v238
    %272 = vmatpush.bf16.msra.mxu0 %v237
    %273 = vmatpush.bf16.msra.mxu0 %v236
    %274 = vmatpush.bf16.msra.mxu0 %v235
    %275 = vmatmul.bf16.gmra.mxu0 %v135
    %v276 = vpop.f32.mrf.mxu0
    %v277 = vadd.f32 0.0, %v276
    %v278 = vpop.f32.mrf.mxu0
    %v279 = vadd.f32 0.0, %v278
    %280 = vmatmul.bf16.gmra.mxu0 %v137
    %v281 = vpop.f32.mrf.mxu0
    %v282 = vadd.f32 0.0, %v281
    %v283 = vpop.f32.mrf.mxu0
    %v284 = vadd.f32 0.0, %v283
    %285 = vmatmul.bf16.gmra.mxu0 %v139
    %v286 = vpop.f32.mrf.mxu0
    %v287 = vadd.f32 0.0, %v286
    %v288 = vpop.f32.mrf.mxu0
    %v289 = vadd.f32 0.0, %v288
    %290 = vmatmul.bf16.gmra.mxu0 %v141
    %v291 = vpop.f32.mrf.mxu0
    %v292 = vadd.f32 0.0, %v291
    %v293 = vpop.f32.mrf.mxu0
    %v294 = vadd.f32 0.0, %v293
    %295 = vmatmul.bf16.gmra.mxu0 %v143
    %v296 = vpop.f32.mrf.mxu0
    %v297 = vadd.f32 0.0, %v296
    %v298 = vpop.f32.mrf.mxu0
    %v299 = vadd.f32 0.0, %v298
    %300 = vmatmul.bf16.gmra.mxu0 %v145
    %v301 = vpop.f32.mrf.mxu0
    %v302 = vadd.f32 0.0, %v301
    %v303 = vpop.f32.mrf.mxu0
    %v304 = vadd.f32 0.0, %v303
    %305 = vmatmul.bf16.gmra.mxu0 %v147
    %v306 = vpop.f32.mrf.mxu0
    %v307 = vadd.f32 0.0, %v306
    %v308 = vpop.f32.mrf.mxu0
    %v309 = vadd.f32 0.0, %v308
    %310 = vmatmul.bf16.gmra.mxu0 %v149
    %v311 = vpop.f32.mrf.mxu0
    %v312 = vadd.f32 0.0, %v311
    %v313 = vpop.f32.mrf.mxu0
    %v314 = vadd.f32 0.0, %v313
    %315 = vmatmul.bf16.gmra.mxu0 %v151
    %v316 = vpop.f32.mrf.mxu0
    %v317 = vadd.f32 0.0, %v316
    %v318 = vpop.f32.mrf.mxu0
    %v319 = vadd.f32 0.0, %v318
    %320 = vdwg.mxu0
    %321 = vmatpush.bf16.msra.mxu0 %v250
    %322 = vmatpush.bf16.msra.mxu0 %v249
    %323 = vmatpush.bf16.msra.mxu0 %v248
    %324 = vmatpush.bf16.msra.mxu0 %v247
    %325 = vmatpush.bf16.msra.mxu0 %v246
    %326 = vmatpush.bf16.msra.mxu0 %v245
    %327 = vmatpush.bf16.msra.mxu0 %v244
    %328 = vmatpush.bf16.msra.mxu0 %v243
    %329 = vmatmul.bf16.gmra.mxu0 %v136
    %v330 = vpop.f32.mrf.mxu0
    %v331 = vadd.f32 %v277, %v330
    %v332 = vpop.f32.mrf.mxu0
    %v333 = vadd.f32 %v279, %v332
    %334 = vmatmul.bf16.gmra.mxu0 %v138
    %v335 = vpop.f32.mrf.mxu0
    %v336 = vadd.f32 %v282, %v335
    %v337 = vpop.f32.mrf.mxu0
    %v338 = vadd.f32 %v284, %v337
    %339 = vmatmul.bf16.gmra.mxu0 %v140
    %v340 = vpop.f32.mrf.mxu0
    %v341 = vadd.f32 %v287, %v340
    %v342 = vpop.f32.mrf.mxu0
    %v343 = vadd.f32 %v289, %v342
    %344 = vmatmul.bf16.gmra.mxu0 %v142
    %v345 = vpop.f32.mrf.mxu0
    %v346 = vadd.f32 %v292, %v345
    %v347 = vpop.f32.mrf.mxu0
    %v348 = vadd.f32 %v294, %v347
    %349 = vmatmul.bf16.gmra.mxu0 %v144
    %v350 = vpop.f32.mrf.mxu0
    %v351 = vadd.f32 %v297, %v350
    %v352 = vpop.f32.mrf.mxu0
    %v353 = vadd.f32 %v299, %v352
    %354 = vmatmul.bf16.gmra.mxu0 %v146
    %v355 = vpop.f32.mrf.mxu0
    %v356 = vadd.f32 %v302, %v355
    %v357 = vpop.f32.mrf.mxu0
    %v358 = vadd.f32 %v304, %v357
    %359 = vmatmul.bf16.gmra.mxu0 %v148
    %v360 = vpop.f32.mrf.mxu0
    %v361 = vadd.f32 %v307, %v360
    %v362 = vpop.f32.mrf.mxu0
    %v363 = vadd.f32 %v309, %v362
    %364 = vmatmul.bf16.gmra.mxu0 %v150
    %v365 = vpop.f32.mrf.mxu0
    %v366 = vadd.f32 %v312, %v365
    %v367 = vpop.f32.mrf.mxu0
    %v368 = vadd.f32 %v314, %v367
    %369 = vmatmul.bf16.gmra.mxu0 %v152
    %v370 = vpop.f32.mrf.mxu0
    %v371 = vadd.f32 %v317, %v370
    %v372 = vpop.f32.mrf.mxu0
    %v373 = vadd.f32 %v319, %v372
    %374 = vdwg.mxu0
    %v375 = vmul.f32 %v331, 2.0
    %v376 = vmul.f32 %v333, 2.0
    %v377 = vmul.f32 %v336, 2.0
    %v378 = vmul.f32 %v338, 2.0
    %v379 = vmul.f32 %v341, 2.0
    %v380 = vmul.f32 %v343, 2.0
    %v381 = vmul.f32 %v346, 2.0
    %v382 = vmul.f32 %v348, 2.0
    %v383 = vmul.f32 %v351, 2.0
    %v384 = vmul.f32 %v353, 2.0
    %v385 = vmul.f32 %v356, 2.0
    %v386 = vmul.f32 %v358, 2.0
    %v387 = vmul.f32 %v361, 2.0
    %v388 = vmul.f32 %v363, 2.0
    %v389 = vmul.f32 %v366, 2.0
    %v390 = vmul.f32 %v368, 2.0
    %v391 = vmul.f32 %v371, 2.0
    %v392 = vmul.f32 %v373, 2.0
    %v393 = vld [vmem:[%s2] sm:$0x3]
    %v394 = vunpack.c.l.bf16 %v393
    %vm395 = vcmask 31744
    %v397 = vsel %vm395, %v375, 0
    %v400 = vsel %vm395, %v376, 0
    %v403 = vsel %vm395, %v377, 0
    %v406 = vsel %vm395, %v378, 0
    %v409 = vsel %vm395, %v379, 0
    %v412 = vsel %vm395, %v380, 0
    %v415 = vsel %vm395, %v381, 0
    %v418 = vsel %vm395, %v382, 0
    %v421 = vsel %vm395, %v383, 0
    %v424 = vsel %vm395, %v384, 0
    %v427 = vsel %vm395, %v385, 0
    %v430 = vsel %vm395, %v386, 0
    %v433 = vsel %vm395, %v387, 0
    %v436 = vsel %vm395, %v388, 0
    %v439 = vsel %vm395, %v389, 0
    %v442 = vsel %vm395, %v390, 0
    %v445 = vsel %vm395, %v391, 0
    %v448 = vsel %vm395, %v392, 0
    %vm450 = vcmask 1043456
    %v452 = vsel %vm450, %v394, 0
    %454 = vmatpush.msra.mxu0 0.0
    %455 = vmatpush.msra.mxu0 0.0
    %456 = vmatpush.msra.mxu0 0.0
    %457 = vmatpush.msra.mxu0 0.0
    %458 = vmatpush.msra.mxu0 0.0
    %459 = vmatpush.msra.mxu0 0.0
    %460 = vmatpush.msra.mxu0 0.0
    %461 = vmatpush.msra.mxu0 0.0
    %462 = vmatpush.msra.mxu0 0.0
    %463 = vmatpush.msra.mxu0 0.0
    %464 = vmatpush.msra.mxu0 0.0
    %465 = vmatpush.msra.mxu0 0.0
    %466 = vmatpush.msra.mxu0 0.0
    %467 = vmatpush.msra.mxu0 0.0
    %468 = vmatpush.msra.mxu0 0.0
    %469 = vmatpush.msra.mxu0 %v452
    %470 = vmatmul.f32.gmra.mxu0 %v397
    %v471 = vpop.f32.mrf.mxu0
    %v472 = vadd.f32 0.0, %v471
    %473 = vmatmul.f32.gmra.mxu0 %v400
    %v474 = vpop.f32.mrf.mxu0
    %v475 = vadd.f32 0.0, %v474
    %476 = vmatmul.f32.gmra.mxu0 %v403
    %v477 = vpop.f32.mrf.mxu0
    %v478 = vadd.f32 0.0, %v477
    %479 = vmatmul.f32.gmra.mxu0 %v406
    %v480 = vpop.f32.mrf.mxu0
    %v481 = vadd.f32 0.0, %v480
    %482 = vmatmul.f32.gmra.mxu0 %v409
    %v483 = vpop.f32.mrf.mxu0
    %v484 = vadd.f32 0.0, %v483
    %485 = vmatmul.f32.gmra.mxu0 %v412
    %v486 = vpop.f32.mrf.mxu0
    %v487 = vadd.f32 0.0, %v486
    %488 = vmatmul.f32.gmra.mxu0 %v415
    %v489 = vpop.f32.mrf.mxu0
    %v490 = vadd.f32 0.0, %v489
    %491 = vmatmul.f32.gmra.mxu0 %v418
    %v492 = vpop.f32.mrf.mxu0
    %v493 = vadd.f32 0.0, %v492
    %494 = vmatmul.f32.gmra.mxu0 %v421
    %v495 = vpop.f32.mrf.mxu0
    %v496 = vadd.f32 0.0, %v495
    %497 = vmatmul.f32.gmra.mxu0 %v424
    %v498 = vpop.f32.mrf.mxu0
    %v499 = vadd.f32 0.0, %v498
    %500 = vmatmul.f32.gmra.mxu0 %v427
    %v501 = vpop.f32.mrf.mxu0
    %v502 = vadd.f32 0.0, %v501
    %503 = vmatmul.f32.gmra.mxu0 %v430
    %v504 = vpop.f32.mrf.mxu0
    %v505 = vadd.f32 0.0, %v504
    %506 = vmatmul.f32.gmra.mxu0 %v433
    %v507 = vpop.f32.mrf.mxu0
    %v508 = vadd.f32 0.0, %v507
    %509 = vmatmul.f32.gmra.mxu0 %v436
    %v510 = vpop.f32.mrf.mxu0
    %v511 = vadd.f32 0.0, %v510
    %512 = vmatmul.f32.gmra.mxu0 %v439
    %v513 = vpop.f32.mrf.mxu0
    %v514 = vadd.f32 0.0, %v513
    %515 = vmatmul.f32.gmra.mxu0 %v442
    %v516 = vpop.f32.mrf.mxu0
    %v517 = vadd.f32 0.0, %v516
    %518 = vmatmul.f32.gmra.mxu0 %v445
    %v519 = vpop.f32.mrf.mxu0
    %v520 = vadd.f32 0.0, %v519
    %521 = vmatmul.f32.gmra.mxu0 %v448
    %v522 = vpop.f32.mrf.mxu0
    %v523 = vadd.f32 0.0, %v522
    %524 = vdwg.mxu0
    %v525 = vpack.c.bf16 %v472, %v472
    %v526 = vpack.c.bf16 %v475, %v475
    %v527 = vpack.c.bf16 %v478, %v478
    %v528 = vpack.c.bf16 %v481, %v481
    %v529 = vpack.c.bf16 %v484, %v484
    %v530 = vpack.c.bf16 %v487, %v487
    %v531 = vpack.c.bf16 %v490, %v490
    %v532 = vpack.c.bf16 %v493, %v493
    %v533 = vpack.c.bf16 %v496, %v496
    %v534 = vpack.c.bf16 %v499, %v499
    %v535 = vpack.c.bf16 %v502, %v502
    %v536 = vpack.c.bf16 %v505, %v505
    %v537 = vpack.c.bf16 %v508, %v508
    %v538 = vpack.c.bf16 %v511, %v511
    %v539 = vpack.c.bf16 %v514, %v514
    %v540 = vpack.c.bf16 %v517, %v517
    %v541 = vpack.c.bf16 %v520, %v520
    %v542 = vpack.c.bf16 %v523, %v523
    %543 = vst [vmem:[#allocation5] sm:$0xf] %v525
    %544 = vst [vmem:[#allocation5 + $0x4] sm:$0xf] %v526
    %545 = vst [vmem:[#allocation5 + $0x8] sm:$0xf] %v527
    %546 = vst [vmem:[#allocation5 + $0xc] sm:$0xf] %v528
    %547 = vst [vmem:[#allocation5 + $0x10] sm:$0xf] %v529
    %548 = vst [vmem:[#allocation5 + $0x14] sm:$0xf] %v530
    %549 = vst [vmem:[#allocation5 + $0x18] sm:$0xf] %v531
    %550 = vst [vmem:[#allocation5 + $0x1c] sm:$0xf] %v532
    %551 = vst [vmem:[#allocation5 + $0x20] sm:$0xf] %v533
    %552 = vst [vmem:[#allocation5 + $0x24] sm:$0xf] %v534
    %553 = vst [vmem:[#allocation5 + $0x28] sm:$0xf] %v535
    %554 = vst [vmem:[#allocation5 + $0x2c] sm:$0xf] %v536
    %555 = vst [vmem:[#allocation5 + $0x30] sm:$0xf] %v537
    %556 = vst [vmem:[#allocation5 + $0x34] sm:$0xf] %v538
    %557 = vst [vmem:[#allocation5 + $0x38] sm:$0xf] %v539
    %558 = vst [vmem:[#allocation5 + $0x3c] sm:$0xf] %v540
    %559 = vst [vmem:[#allocation5 + $0x40] sm:$0xf] %v541
    %560 = vst [vmem:[#allocation5 + $0x44] sm:$0xf] %v542
    // Predicated region
    $region18: #{tpu_custom_call.1} parent=1 // pred_check
      _
    $region19: #{tpu_custom_call.1} parent=1 // pred_check_branch
      %562 = sbr.rel (0) target = $region21
    $region20: #{tpu_custom_call.1} parent=1 // pred_region
      %564 = vsyncadd [#allocation4], 0
      %s565 = sshll.u32 [#allocation5], 4
      %s566 = int_to_ptr.vmem [resolvable:$true] %s565
      %s567 = sshll.u32 %s3, 4
      %s568 = int_to_ptr.hbm [resolvable:$true] %s567
      %573 = dma.vmem_to_hbm [thread:$0]  %s566, 1152, %s568, [#allocation4], 64, 64, 4
    $region21: #{tpu_custom_call.1} parent=1 // pred_fallthru
      _
    // Predicated region
    $region22: #{tpu_custom_call.1} parent=1 // pred_check
      _
    $region23: #{tpu_custom_call.1} parent=1 // pred_check_branch
      %575 = sbr.rel (0) target = $region25
    $region24: #{tpu_custom_call.1} parent=1 // pred_region
      %577 = dma.done [#allocation4], 1152
    $region25: #{tpu_custom_call.1} parent=1 // pred_fallthru
      _
    %578 = vsyncpa [#allocation3], 1
    %579 = vsyncpa [#allocation4], 1

</llo_original>
